<compile_context>
chip_gen: v5e
topology: v5e:2x2
jax: 0.10.0
libtpu: 0.0.40
codegen_flags: <defaults>
</compile_context>

<pallas_src>
import math
import functools

import jax
import jax.numpy as jnp
from jax.experimental import pallas as pl
from jax.experimental.pallas import tpu as pltpu

INV_SQRT2 = 1.0 / math.sqrt(2.0)
LANE = 128
SUBLANE = 8


def _round_up(x, m):
    return (x + m - 1) // m * m


def _mlp_kernel(x_ref, w1_ref, b1_ref, w2_ref, b2_ref, o_ref):
    # x_ref:  (TB, D_in)        one batch tile (f32 from HBM)
    # w1_ref: (D_in, D_hid)     Linear1 weight^T, BN scale folded in (bf16/f32)
    # b1_ref: (1, D_hid)        Linear1 bias with BN affine folded in (f32)
    # w2_ref: (D_hid, D_out_p)  head weight^T, zero-padded to 128 lanes
    # b2_ref: (1, D_out_p)      head bias, zero-padded (f32)
    # o_ref:  (TB, D_out_p)     lane-dense output tile
    x = x_ref[...]
    w1 = w1_ref[...]
    if x.dtype != w1.dtype:
        x = x.astype(w1.dtype)          # only the activation cast stays in-kernel

    # Linear 1 (+ folded BatchNorm) on the MXU, f32 accumulation.
    h = jnp.dot(x, w1, preferred_element_type=jnp.float32)
    h = h + b1_ref[...]

    # GELU, exact erf form (matches nn.GELU(approximate='none')), in f32.
    h = 0.5 * h * (1.0 + jax.lax.erf(h * INV_SQRT2))

    # Dropout(p=0.01) is identity in eval mode.
    # TODO(synk): training-mode stochastic dropout / BN batch-stat update omitted.

    w2 = w2_ref[...]
    if h.dtype != w2.dtype:
        h = h.astype(w2.dtype)

    # Head Linear on the MXU (N padded to 128 -> clean, unmasked vst).
    out = jnp.dot(h, w2, preferred_element_type=jnp.float32)
    out = out + b2_ref[...]
    o_ref[...] = out.astype(o_ref.dtype)


@functools.partial(jax.jit, static_argnames=("block_b", "out_dtype"))
def mlp_classifier_forward_padded(x, w1f, b1f, w2p, b2p, *,
                                  block_b=1024, out_dtype=jnp.float32):
    """Returns lane-padded logits of shape (B, round_up(num_classes, 128)).

    Columns >= num_classes are exactly zero; slice them off lazily at the
    consumer (or fuse argmax / log-softmax downstream) — no copy is done here.
    """
    B, D_in = x.shape
    D_hid = w1f.shape[1]
    D_out_p = w2p.shape[1]

    # Batch tile: multiple of 8 sublanes, large enough to amortize per-step
    # overhead, capped so the grid has >= 2 steps whenever possible (v7x has
    # 2 TensorCores; the extra step is ~0.35us on single-TC v5e/v6e).
    tb = min(block_b, _round_up(pl.cdiv(B, 2), SUBLANE))
    tb = max(SUBLANE, tb)
    grid = (pl.cdiv(B, tb),)   # ragged final block: store is clipped by Pallas

    out = pl.pallas_call(
        _mlp_kernel,
        out_shape=jax.ShapeDtypeStruct((B, D_out_p), out_dtype),
        grid_spec=pltpu.PrefetchScalarGridSpec(
            num_scalar_prefetch=0,
            grid=grid,
            in_specs=[
                pl.BlockSpec((tb, D_in), lambda i: (i, 0)),        # x tile
                pl.BlockSpec((D_in, D_hid), lambda i: (0, 0)),     # w1 (folded)
                pl.BlockSpec((1, D_hid), lambda i: (0, 0)),        # b1 (folded)
                pl.BlockSpec((D_hid, D_out_p), lambda i: (0, 0)),  # w2 (padded)
                pl.BlockSpec((1, D_out_p), lambda i: (0, 0)),      # b2 (padded)
            ],
            out_specs=pl.BlockSpec((tb, D_out_p), lambda i: (i, 0)),
        ),
        compiler_params=pltpu.CompilerParams(
            dimension_semantics=("parallel",)),
    )(x, w1f, b1f, w2p, b2p)
    return out


def init_params(key, embed_dim, expanded_dim, num_classes):
    """PyTorch-default-style init (uniform(+-1/sqrt(fan_in))) + non-trivial
    BatchNorm running stats so the BN-fold is actually exercised."""
    k1, k2, k3, k4, k5, k6, k7, k8 = jax.random.split(key, 8)

    bound1 = 1.0 / math.sqrt(embed_dim)
    w1 = jax.random.uniform(k1, (embed_dim, expanded_dim), jnp.float32,
                            -bound1, bound1)           # stored [in, out]
    b1 = jax.random.uniform(k2, (1, expanded_dim), jnp.float32,
                            -bound1, bound1)

    gamma = 1.0 + 0.1 * jax.random.normal(k5, (1, expanded_dim), jnp.float32)
    beta = 0.1 * jax.random.normal(k6, (1, expanded_dim), jnp.float32)
    running_mean = 0.1 * jax.random.normal(k7, (1, expanded_dim), jnp.float32)
    running_var = jnp.abs(
        1.0 + 0.1 * jax.random.normal(k8, (1, expanded_dim), jnp.float32))
    eps = 1e-5

    bound2 = 1.0 / math.sqrt(expanded_dim)
    w2 = jax.random.uniform(k3, (expanded_dim, num_classes), jnp.float32,
                            -bound2, bound2)           # stored [in, out]
    b2 = jax.random.uniform(k4, (1, num_classes), jnp.float32,
                            -bound2, bound2)

    return dict(w1=w1, b1=b1, gamma=gamma, beta=beta,
                running_mean=running_mean, running_var=running_var, eps=eps,
                w2=w2, b2=b2)


def prepare_kernel_params(p, *, matmul_dtype=jnp.bfloat16):
    """Fold eval-mode BatchNorm into Linear1, zero-pad the head to 128 lanes,
    and pre-cast the matmul operands (weights) to `matmul_dtype` once.
    Biases stay f32 (added after the f32-accumulating MXU)."""
    bn_scale = p["gamma"] / jnp.sqrt(p["running_var"] + p["eps"])
    bn_shift = p["beta"] - p["running_mean"] * bn_scale

    w1f = (p["w1"] * bn_scale).astype(matmul_dtype)     # per-output-column scale
    b1f = (p["b1"] * bn_scale + bn_shift).astype(jnp.float32)

    num_classes = p["w2"].shape[1]
    d_out_p = _round_up(num_classes, LANE)
    w2p = jnp.pad(p["w2"], ((0, 0), (0, d_out_p - num_classes))
                  ).astype(matmul_dtype)
    b2p = jnp.pad(p["b2"], ((0, 0), (0, d_out_p - num_classes))
                  ).astype(jnp.float32)
    return w1f, b1f, w2p, b2p


def reference_forward(x, p):
    """Pure-JAX reference with the original (unfolded) module semantics."""
    h = x @ p["w1"] + p["b1"]
    bn_scale = p["gamma"] / jnp.sqrt(p["running_var"] + p["eps"])
    bn_shift = p["beta"] - p["running_mean"] * bn_scale
    h = h * bn_scale + bn_shift
    h = 0.5 * h * (1.0 + jax.lax.erf(h * INV_SQRT2))
    return h @ p["w2"] + p["b2"]


if __name__ == "__main__":
    embed_dim, expanded_dim, num_classes = 32, 128, 10

    key = jax.random.PRNGKey(0)
    kx1, kx2, kp = jax.random.split(key, 3)
    params = init_params(kp, embed_dim, expanded_dim, num_classes)

    kparams_f32 = prepare_kernel_params(params, matmul_dtype=jnp.float32)
    kparams_bf16 = prepare_kernel_params(params)   # bf16 MXU operands (default)

    # Small-shape correctness check (single tile, grid=(1,)), full-f32 path.
    x_small = jax.random.normal(kx1, (8, embed_dim), jnp.float32)
    out_small = jax.block_until_ready(
        mlp_classifier_forward_padded(x_small, *kparams_f32))
    ref_small = reference_forward(x_small, params)
    assert out_small.shape == (8, _round_up(num_classes, LANE))
    assert jnp.allclose(out_small[:, :num_classes], ref_small,
                        atol=1e-4, rtol=1e-4), "small-batch mismatch vs reference"
    # Padded lanes are exact zeros (zero-padded W2/b2 columns).
    assert jnp.all(out_small[:, num_classes:] == 0.0)

    # Ragged batch (500 rows): >=2 grid steps (v7x dual-TC), clipped final tile.
    x_big = jax.random.normal(kx2, (500, embed_dim), jnp.float32)
    ref_big = reference_forward(x_big, params)

    out_big_f32 = jax.block_until_ready(
        mlp_classifier_forward_padded(x_big, *kparams_f32))
    assert out_big_f32.shape == (500, _round_up(num_classes, LANE))
    assert jnp.allclose(out_big_f32[:, :num_classes], ref_big,
                        atol=1e-4, rtol=1e-4), "large-batch mismatch vs reference"

    # Default fast path: bf16 MXU operands, f32 accumulation + f32 GELU.
    out_big_bf16 = jax.block_until_ready(
        mlp_classifier_forward_padded(x_big, *kparams_bf16))
    assert jnp.allclose(out_big_bf16[:, :num_classes], ref_big,
                        atol=5e-2, rtol=5e-2), "bf16-matmul path mismatch vs reference"

    print("KERNEL_OK")
</pallas_src>

<mosaic_0001>
module attributes {stable_mosaic.version = 11 : i64} {
  func.func @_mlp_kernel(%arg0: i32, %arg1: memref<8x32xf32, #tpu.memory_space<vmem>>, %arg2: memref<32x128xf32, #tpu.memory_space<vmem>>, %arg3: memref<1x128xf32, #tpu.memory_space<vmem>>, %arg4: memref<128x128xf32, #tpu.memory_space<vmem>>, %arg5: memref<1x128xf32, #tpu.memory_space<vmem>>, %arg6: memref<8x128xf32, #tpu.memory_space<vmem>>) attributes {dimension_semantics = [#tpu.dimension_semantics<parallel>], iteration_bounds = array<i64: 1>, scalar_prefetch = 0 : i64, scratch_operands = 0 : i64, tpu.core_type = #tpu.core_type<tc>, window_params = [{transform_indices = @transform_0, window_bounds = array<i64: 8, 32>}, {pipeline_mode = #tpu.pipeline_mode<synchronous>, transform_indices = @transform_1, window_bounds = array<i64: 32, 128>}, {pipeline_mode = #tpu.pipeline_mode<synchronous>, transform_indices = @transform_2, window_bounds = array<i64: 1, 128>}, {pipeline_mode = #tpu.pipeline_mode<synchronous>, transform_indices = @transform_3, window_bounds = array<i64: 128, 128>}, {pipeline_mode = #tpu.pipeline_mode<synchronous>, transform_indices = @transform_4, window_bounds = array<i64: 1, 128>}, {transform_indices = @transform_5, window_bounds = array<i64: 8, 128>}]} {
    %c0 = arith.constant 0 : index
    %c0_0 = arith.constant 0 : index
    %0 = vector.load %arg1[%c0, %c0_0] : memref<8x32xf32, #tpu.memory_space<vmem>>, vector<8x32xf32>
    %c0_1 = arith.constant 0 : index
    %c0_2 = arith.constant 0 : index
    %1 = vector.load %arg2[%c0_1, %c0_2] : memref<32x128xf32, #tpu.memory_space<vmem>>, vector<32x128xf32>
    %cst = arith.constant dense<0.000000e+00> : vector<8x128xf32>
    %2 = tpu.matmul %0, %1, %cst {dimension_numbers = #tpu.dot_dimension_numbers<[1], [0], [0], [1], [0, 0, 1, 1], [], []>} : vector<8x32xf32>, vector<32x128xf32>, vector<8x128xf32> -> vector<8x128xf32>
    %c0_3 = arith.constant 0 : index
    %c0_4 = arith.constant 0 : index
    %3 = vector.load %arg3[%c0_3, %c0_4] : memref<1x128xf32, #tpu.memory_space<vmem>>, vector<1x128xf32>
    %4 = vector.broadcast %3 : vector<1x128xf32> to vector<8x128xf32>
    %5 = arith.addf %2, %4 : vector<8x128xf32>
    %cst_5 = arith.constant 5.000000e-01 : f32
    %6 = vector.broadcast %cst_5 : f32 to vector<8x128xf32>
    %7 = arith.mulf %6, %5 : vector<8x128xf32>
    %cst_6 = arith.constant 0.707106769 : f32
    %8 = vector.broadcast %cst_6 : f32 to vector<8x128xf32>
    %9 = arith.mulf %5, %8 : vector<8x128xf32>
    %10 = math.erf %9 : vector<8x128xf32>
    %cst_7 = arith.constant 1.000000e+00 : f32
    %11 = vector.broadcast %cst_7 : f32 to vector<8x128xf32>
    %12 = arith.addf %11, %10 : vector<8x128xf32>
    %13 = arith.mulf %7, %12 : vector<8x128xf32>
    %c0_8 = arith.constant 0 : index
    %c0_9 = arith.constant 0 : index
    %14 = vector.load %arg4[%c0_8, %c0_9] : memref<128x128xf32, #tpu.memory_space<vmem>>, vector<128x128xf32>
    %cst_10 = arith.constant dense<0.000000e+00> : vector<8x128xf32>
    %15 = tpu.matmul %13, %14, %cst_10 {dimension_numbers = #tpu.dot_dimension_numbers<[1], [0], [0], [1], [0, 0, 1, 1], [], []>} : vector<8x128xf32>, vector<128x128xf32>, vector<8x128xf32> -> vector<8x128xf32>
    %c0_11 = arith.constant 0 : index
    %c0_12 = arith.constant 0 : index
    %16 = vector.load %arg5[%c0_11, %c0_12] : memref<1x128xf32, #tpu.memory_space<vmem>>, vector<1x128xf32>
    %17 = vector.broadcast %16 : vector<1x128xf32> to vector<8x128xf32>
    %18 = arith.addf %15, %17 : vector<8x128xf32>
    %c0_13 = arith.constant 0 : index
    %c0_14 = arith.constant 0 : index
    %19 = vector.load %arg6[%c0_13, %c0_14] : memref<8x128xf32, #tpu.memory_space<vmem>>, vector<8x128xf32>
    tpu.vector_store %arg6[%c0_13, %c0_14], %18 {strides = array<i32>} : memref<8x128xf32, #tpu.memory_space<vmem>>, vector<8x128xf32>,
    return
  }
  func.func @transform_0(%arg0: i32) -> (i32, i32) {
    %c0_i32 = arith.constant 0 : i32
    %c0_i32_0 = arith.constant 0 : i32
    return %arg0, %c0_i32 : i32, i32
  }
  func.func @transform_1(%arg0: i32) -> (i32, i32) {
    %c0_i32 = arith.constant 0 : i32
    %c0_i32_0 = arith.constant 0 : i32
    %c0_i32_1 = arith.constant 0 : i32
    return %c0_i32, %c0_i32_0 : i32, i32
  }
  func.func @transform_2(%arg0: i32) -> (i32, i32) {
    %c0_i32 = arith.constant 0 : i32
    %c0_i32_0 = arith.constant 0 : i32
    %c0_i32_1 = arith.constant 0 : i32
    return %c0_i32, %c0_i32_0 : i32, i32
  }
  func.func @transform_3(%arg0: i32) -> (i32, i32) {
    %c0_i32 = arith.constant 0 : i32
    %c0_i32_0 = arith.constant 0 : i32
    %c0_i32_1 = arith.constant 0 : i32
    return %c0_i32, %c0_i32_0 : i32, i32
  }
  func.func @transform_4(%arg0: i32) -> (i32, i32) {
    %c0_i32 = arith.constant 0 : i32
    %c0_i32_0 = arith.constant 0 : i32
    %c0_i32_1 = arith.constant 0 : i32
    return %c0_i32, %c0_i32_0 : i32, i32
  }
  func.func @transform_5(%arg0: i32) -> (i32, i32) {
    %c0_i32 = arith.constant 0 : i32
    %c0_i32_0 = arith.constant 0 : i32
    return %arg0, %c0_i32 : i32, i32
  }
}

</mosaic_0001>

<llo_original>
// kernel: mlp_classifier_forward_padded.1
$region0: #{mlp_classifier_forward_padded.1}
  #allocation0 [shape = 'u32[]', space=smem, size = 0x4, offset = 0x4, fixed_abs, tag = 'smem constant byte address 0x4 - core index']
  #allocation1 [shape = 'u32[72,128]{1,0:T(1,128)}', space=vmem, size = 0x9000, scoped, tag = 'internal scratch']
  %s0 = inlined_call_operand.hbm [shape: f32[8,32], index: 0, kind: input, shape index: {}]
  %s1 = inlined_call_operand.hbm [shape: f32[32,128], index: 1, kind: input, shape index: {}]
  %s2 = inlined_call_operand.vmem [shape: f32[1,128], index: 2, kind: input, shape index: {}]
  %s3 = inlined_call_operand.hbm [shape: f32[128,128], index: 3, kind: input, shape index: {}]
  %s4 = inlined_call_operand.vmem [shape: f32[1,128], index: 4, kind: input, shape index: {}]
  %s5 = inlined_call_operand.hbm [shape: f32[8,128], index: 5, kind: output, shape index: {}]
  %s6 = sld [smem:[#allocation0]]
  $region42: #{mlp_classifier_forward_padded.1} parent=0
    _
  %s8 = ssub.s32 1, %s6
  %s9 = scalar_select 0, %s8, %s6
  $region1: #{mlp_classifier_forward_padded.1} parent=0
    #allocation2 [shape = 'u8[4096]{0}', space=vmem, size = 0x1000, scoped, tag = 'input window, operand 0, single buffered']
    #allocation3 [shape = 's32[1]{0}', space=sflag, size = 0x4, scoped, tag = 'scoped memory for mlp_classifier_forward_padded.1']
    #allocation4 [shape = 's32[1]{0}', space=sflag, size = 0x4, scoped, tag = 'scoped memory for mlp_classifier_forward_padded.1']
    #allocation5 [shape = 'u8[16384]{0}', space=vmem, size = 0x4000, scoped, tag = 'input window, operand 1, single buffered']
    #allocation6 [shape = 's32[1]{0}', space=sflag, size = 0x4, scoped, tag = 'scoped memory for mlp_classifier_forward_padded.1']
    #allocation7 [shape = 'u8[65536]{0}', space=vmem, size = 0x10000, scoped, tag = 'input window, operand 3, single buffered']
    #allocation8 [shape = 'u8[4096]{0}', space=vmem, size = 0x1000, scoped, tag = 'output window, operand 0, single buffered']
    %10 = vsyncpa [#allocation3], 0
    %11 = vsyncpa [#allocation6], 0
    %12 = vsyncpa [#allocation4], 0
    // Predicated region
    $region2: #{mlp_classifier_forward_padded.1} parent=1 // pred_check
      _
    $region3: #{mlp_classifier_forward_padded.1} parent=1 // pred_check_branch
      %14 = sbr.rel (0) target = $region5
    $region4: #{mlp_classifier_forward_padded.1} parent=1 // pred_region
      %16 = vsyncadd [#allocation3], 0
      %s18 = sshll.u32 %s0, 4
      %s19 = int_to_ptr.hbm [resolvable:$true] %s18
      %s20 = sshll.u32 [#allocation2], 4
      %s21 = int_to_ptr.vmem [resolvable:$true] %s20
      %23 = dma.hbm_to_vmem [thread:$0]  %s19, 128, %s21, [#allocation3]
    $region5: #{mlp_classifier_forward_padded.1} parent=1 // pred_fallthru
      _
    // Predicated region
    $region6: #{mlp_classifier_forward_padded.1} parent=1 // pred_check
      _
    $region7: #{mlp_classifier_forward_padded.1} parent=1 // pred_check_branch
      %25 = sbr.rel (0) target = $region9
    $region8: #{mlp_classifier_forward_padded.1} parent=1 // pred_region
      %27 = vsyncadd [#allocation6], 0
      %s28 = sshll.u32 %s1, 4
      %s29 = int_to_ptr.hbm [resolvable:$true] %s28
      %s30 = sshll.u32 [#allocation5], 4
      %s31 = int_to_ptr.vmem [resolvable:$true] %s30
      %36 = dma.hbm_to_vmem [thread:$0]  %s29, 512, %s31, [#allocation6], 128, 128, 8
    $region9: #{mlp_classifier_forward_padded.1} parent=1 // pred_fallthru
      _
    // Predicated region
    $region10: #{mlp_classifier_forward_padded.1} parent=1 // pred_check
      _
    $region11: #{mlp_classifier_forward_padded.1} parent=1 // pred_check_branch
      %38 = sbr.rel (0) target = $region13
    $region12: #{mlp_classifier_forward_padded.1} parent=1 // pred_region
      _
    $region13: #{mlp_classifier_forward_padded.1} parent=1 // pred_fallthru
      _
    // Predicated region
    $region14: #{mlp_classifier_forward_padded.1} parent=1 // pred_check
      _
    $region15: #{mlp_classifier_forward_padded.1} parent=1 // pred_check_branch
      %40 = sbr.rel (0) target = $region17
    $region16: #{mlp_classifier_forward_padded.1} parent=1 // pred_region
      %42 = vsyncadd [#allocation6], 0
      %s43 = sshll.u32 %s3, 4
      %s44 = int_to_ptr.hbm [resolvable:$true] %s43
      %s45 = sshll.u32 [#allocation7], 4
      %s46 = int_to_ptr.vmem [resolvable:$true] %s45
      %51 = dma.hbm_to_vmem [thread:$0]  %s44, 2048, %s46, [#allocation6], 128, 128, 8
    $region17: #{mlp_classifier_forward_padded.1} parent=1 // pred_fallthru
      _
    // Predicated region
    $region18: #{mlp_classifier_forward_padded.1} parent=1 // pred_check
      _
    $region19: #{mlp_classifier_forward_padded.1} parent=1 // pred_check_branch
      %53 = sbr.rel (0) target = $region21
    $region20: #{mlp_classifier_forward_padded.1} parent=1 // pred_region
      _
    $region21: #{mlp_classifier_forward_padded.1} parent=1 // pred_fallthru
      _
    // Predicated region
    $region22: #{mlp_classifier_forward_padded.1} parent=1 // pred_check
      _
    $region23: #{mlp_classifier_forward_padded.1} parent=1 // pred_check_branch
      %55 = sbr.rel (0) target = $region25
    $region24: #{mlp_classifier_forward_padded.1} parent=1 // pred_region
      %57 = dma.done [#allocation3], 128
    $region25: #{mlp_classifier_forward_padded.1} parent=1 // pred_fallthru
      _
    // Predicated region
    $region26: #{mlp_classifier_forward_padded.1} parent=1 // pred_check
      _
    $region27: #{mlp_classifier_forward_padded.1} parent=1 // pred_check_branch
      %59 = sbr.rel (0) target = $region29
    $region28: #{mlp_classifier_forward_padded.1} parent=1 // pred_region
      %61 = dma.done [#allocation6], 512
    $region29: #{mlp_classifier_forward_padded.1} parent=1 // pred_fallthru
      _
    // Predicated region
    $region30: #{mlp_classifier_forward_padded.1} parent=1 // pred_check
      _
    $region31: #{mlp_classifier_forward_padded.1} parent=1 // pred_check_branch
      %63 = sbr.rel (0) target = $region33
    $region32: #{mlp_classifier_forward_padded.1} parent=1 // pred_region
      %65 = dma.done [#allocation6], 2048
    $region33: #{mlp_classifier_forward_padded.1} parent=1 // pred_fallthru
      _
    %v66 = vld [vmem:[#allocation2] sm:$0xff]
    %v67 = vld [vmem:[#allocation5] sm:$0xff]
    %v68 = vld [vmem:[#allocation5 + $0x8] sm:$0xff]
    %v69 = vld [vmem:[#allocation5 + $0x10] sm:$0xff]
    %v70 = vld [vmem:[#allocation5 + $0x18] sm:$0xff]
    %v71 = vld [vmem:[%s2] sm:$0x1]
    %v73 = vperm.slane %v71, 0
    %vm75 = vcmask 261120
    %v77 = vsel %vm75, %v66, 0
    %79 = vmatpush.msra.mxu0 0.0
    %80 = vmatpush.msra.mxu0 0.0
    %81 = vmatpush.msra.mxu0 0.0
    %82 = vmatpush.msra.mxu0 0.0
    %83 = vmatpush.msra.mxu0 0.0
    %84 = vmatpush.msra.mxu0 0.0
    %85 = vmatpush.msra.mxu0 0.0
    %86 = vmatpush.msra.mxu0 0.0
    %87 = vmatpush.msra.mxu0 0.0
    %88 = vmatpush.msra.mxu0 0.0
    %89 = vmatpush.msra.mxu0 0.0
    %90 = vmatpush.msra.mxu0 0.0
    %91 = vmatpush.msra.mxu0 %v70
    %92 = vmatpush.msra.mxu0 %v69
    %93 = vmatpush.msra.mxu0 %v68
    %94 = vmatpush.msra.mxu0 %v67
    %95 = vmatmul.f32.gmra.mxu0 %v77
    %v96 = vpop.f32.mrf.mxu0
    %v97 = vadd.f32 %v73, %v96
    %98 = vdwg.mxu0
    %v99 = vmul.f32 %v97, 0.5
    %v100 = vmul.f32 %v97, 0.70710677
    %v101 = vmul.f32 %v100, %v100
    %v102 = vmin.f32 16.0, %v101
    %v103 = vmul.f32 %v102, 2.1237322e-06
    %v104 = vadd.f32 %v103, 0.00028619796
    %v105 = vmul.f32 %v102, %v104
    %v106 = vadd.f32 %v105, 0.0036580483
    %v107 = vmul.f32 %v102, %v106
    %v108 = vadd.f32 %v107, 0.05243302
    %v109 = vmul.f32 %v102, %v108
    %v110 = vadd.f32 %v109, 0.18741608
    %v111 = vmul.f32 %v102, %v110
    %v112 = vadd.f32 %v111, 1.1283791
    %v113 = vmul.f32 %v100, %v112
    %v114 = vmul.f32 %v102, 3.8918573e-05
    %v115 = vadd.f32 %v114, 0.001143296
    %v116 = vmul.f32 %v102, %v115
    %v117 = vadd.f32 %v116, 0.014752088
    %v118 = vmul.f32 %v102, %v117
    %v119 = vadd.f32 %v118, 0.112945676
    %v120 = vmul.f32 %v102, %v119
    %v121 = vadd.f32 %v120, 0.4994258
    %v122 = vmul.f32 %v102, %v121
    %v123 = vadd.f32 %v122, 1.0
    %v124 = vrcp.pop %v123
    %v125 = vmul.f32 %v123, %v124
    %v126 = vsub.f32 1.0, %v125
    %v127 = vmul.f32 %v124, %v126
    %v128 = vadd.f32 %v124, %v127
    %vm129 = vweird.f32 %v123
    %vm130 = vweird.f32 %v124
    %vm131 = vmor %vm129, %vm130
    %v132 = vsel %vm131, %v124, %v128
    %v133 = vand.u32 2147483647, %v123
    %vm134 = vcmp.eq.f32.partialorder %v133, 8.507059e+37
    %v135 = vand.u32 %v123, 2147483648
    %v136 = vor.u32 1.1754944e-38, %v135
    %v137 = vsel %vm134, %v136, %v132
    %v138 = vmul.f32 %v113, %v137
    %v139 = vmin.f32 %v138, 1.0
    %v140 = vmax.f32 %v139, -1.0
    %v141 = vadd.f32 %v140, 1.0
    %v142 = vmul.f32 %v99, %v141
    %v143 = vld [vmem:[#allocation7] sm:$0xff]
    %v144 = vld [vmem:[#allocation7 + $0x8] sm:$0xff]
    %v145 = vld [vmem:[#allocation7 + $0x10] sm:$0xff]
    %v146 = vld [vmem:[#allocation7 + $0x18] sm:$0xff]
    %v147 = vld [vmem:[#allocation7 + $0x20] sm:$0xff]
    %v148 = vld [vmem:[#allocation7 + $0x28] sm:$0xff]
    %v149 = vld [vmem:[#allocation7 + $0x30] sm:$0xff]
    %v150 = vld [vmem:[#allocation7 + $0x38] sm:$0xff]
    %v151 = vld [vmem:[#allocation7 + $0x40] sm:$0xff]
    %v152 = vld [vmem:[#allocation7 + $0x48] sm:$0xff]
    %v153 = vld [vmem:[#allocation7 + $0x50] sm:$0xff]
    %v154 = vld [vmem:[#allocation7 + $0x58] sm:$0xff]
    %v155 = vld [vmem:[#allocation7 + $0x60] sm:$0xff]
    %v156 = vld [vmem:[#allocation7 + $0x68] sm:$0xff]
    %v157 = vld [vmem:[#allocation7 + $0x70] sm:$0xff]
    %v158 = vld [vmem:[#allocation7 + $0x78] sm:$0xff]
    %v159 = vld [vmem:[%s4] sm:$0x1]
    %v161 = vperm.slane %v159, 0
    %163 = vmatpush.msra.mxu0 %v158
    %164 = vmatpush.msra.mxu0 %v157
    %165 = vmatpush.msra.mxu0 %v156
    %166 = vmatpush.msra.mxu0 %v155
    %167 = vmatpush.msra.mxu0 %v154
    %168 = vmatpush.msra.mxu0 %v153
    %169 = vmatpush.msra.mxu0 %v152
    %170 = vmatpush.msra.mxu0 %v151
    %171 = vmatpush.msra.mxu0 %v150
    %172 = vmatpush.msra.mxu0 %v149
    %173 = vmatpush.msra.mxu0 %v148
    %174 = vmatpush.msra.mxu0 %v147
    %175 = vmatpush.msra.mxu0 %v146
    %176 = vmatpush.msra.mxu0 %v145
    %177 = vmatpush.msra.mxu0 %v144
    %178 = vmatpush.msra.mxu0 %v143
    %179 = vmatmul.f32.gmra.mxu0 %v142
    %v180 = vpop.f32.mrf.mxu0
    %v181 = vadd.f32 %v161, %v180
    %182 = vdwg.mxu0
    %183 = vst [vmem:[#allocation8] sm:$0xff] %v181
    // Predicated region
    $region34: #{mlp_classifier_forward_padded.1} parent=1 // pred_check
      _
    $region35: #{mlp_classifier_forward_padded.1} parent=1 // pred_check_branch
      %185 = sbr.rel (0) target = $region37
    $region36: #{mlp_classifier_forward_padded.1} parent=1 // pred_region
      %187 = vsyncadd [#allocation4], 0
      %s189 = sshll.u32 [#allocation8], 4
      %s190 = int_to_ptr.vmem [resolvable:$true] %s189
      %s191 = sshll.u32 %s5, 4
      %s192 = int_to_ptr.hbm [resolvable:$true] %s191
      %194 = dma.vmem_to_hbm [thread:$0]  %s190, 128, %s192, [#allocation4]
    $region37: #{mlp_classifier_forward_padded.1} parent=1 // pred_fallthru
      _
    // Predicated region
    $region38: #{mlp_classifier_forward_padded.1} parent=1 // pred_check
      _
    $region39: #{mlp_classifier_forward_padded.1} parent=1 // pred_check_branch
      %196 = sbr.rel (0) target = $region41
    $region40: #{mlp_classifier_forward_padded.1} parent=1 // pred_region
      %198 = dma.done [#allocation4], 128
    $region41: #{mlp_classifier_forward_padded.1} parent=1 // pred_fallthru
      _
    %199 = vsyncpa [#allocation3], 1
    %200 = vsyncpa [#allocation6], 1
    %201 = vsyncpa [#allocation4], 1

</llo_original>
